<compile_context>
chip_gen: v7x
topology: tpu7x:2x2x1
jax: 0.10.0
libtpu: 0.0.40
codegen_flags: <defaults>
</compile_context>

<pallas_src>
import numpy as np
import jax
import jax.numpy as jnp
from jax.experimental import pallas as pl
from jax.experimental.pallas import tpu as pltpu

IGNORE_INDEX = 255
NUM_SPLITS = 2                       # leading "parallel" grid axis (2 TCs on v7x)
_TARGET_X_BYTES = 3 * 1024 * 1024    # ~3 MiB of interpolated logits per step
_MAX_TILE_ROWS = 256
_VMEM_LIMIT_BYTES = 40 * 1024 * 1024 # explicit budget: < v7x 64 MiB physical
# Set to jax.lax.Precision.HIGHEST if a bit-faithful f32 resize matmul is
# required; None keeps Mosaic's default MXU precision (the self-test below is
# constructed to be exact under any MXU precision).
_MATMUL_PRECISION = None


def _round_up(a, m):
    return ((a + m - 1) // m) * m


def _pick_rows_per_tile(num_classes, out_w, out_h, num_splits):
    """Output rows handled per grid step (multiple of 8, VMEM-budgeted)."""
    rows = _TARGET_X_BYTES // max(1, num_classes * out_w * 4)
    rows = max(8, min(_MAX_TILE_ROWS, (rows // 8) * 8))
    cap = _round_up(-(-out_h // num_splits), 8)      # don't exceed one split's rows
    return max(8, min(rows, cap))


def _bilinear_weights_matrix(out_size, in_size):
    """(out_size, in_size) half-pixel bilinear weights: row i holds the (<=2)
    source weights for output index i.  Matches F.interpolate(mode='bilinear',
    align_corners=False) / jax.image.resize(antialias=False)."""
    m = np.zeros((out_size, in_size), np.float32)
    src = (np.arange(out_size, dtype=np.float64) + 0.5) * (in_size / out_size) - 0.5
    src = np.clip(src, 0.0, in_size - 1)
    lo = np.minimum(np.floor(src).astype(np.int64), in_size - 1)
    hi = np.minimum(lo + 1, in_size - 1)
    w_hi = (src - lo).astype(np.float32)
    rows = np.arange(out_size)
    np.add.at(m, (rows, lo), 1.0 - w_hi)
    np.add.at(m, (rows, hi), w_hi)
    return m


def _fused_resize_ce_kernel(logits_ref, ah_ref, aw_ref, label_ref,
                            loss_ref, correct_ref):
    # grid = (split, batch, row_tile); outputs are resident (TR, W) accumulator
    # blocks (one per split), zeroed at each split's first step.
    n = pl.program_id(1)
    r = pl.program_id(2)

    @pl.when((n == 0) & (r == 0))
    def _init():
        loss_ref[...] = jnp.zeros_like(loss_ref)
        correct_ref[...] = jnp.zeros_like(correct_ref)

    small = logits_ref[0].astype(jnp.float32)        # (C, Hc, Wc) native->f32
    C, Hc, Wc = small.shape
    a_h = ah_ref[...]                                # (TR, Hc) this tile's rows
    TR = a_h.shape[0]
    a_w = aw_ref[...]                                # (Wc, W) shared width matrix
    W = a_w.shape[1]

    # --- fused bilinear resize on the MXU (height, then width) ---
    a_h_b = jnp.broadcast_to(a_h[None], (C, TR, Hc))             # tiny
    tmp = jax.lax.dot_general(                                   # (C, TR, Wc)
        a_h_b, small,
        dimension_numbers=(((2,), (1,)), ((0,), (0,))),
        preferred_element_type=jnp.float32, precision=_MATMUL_PRECISION)
    x = jax.lax.dot_general(                                     # (C*TR, W)
        tmp.reshape(C * TR, Wc), a_w,
        dimension_numbers=(((1,), (0,)), ((), ())),
        preferred_element_type=jnp.float32, precision=_MATMUL_PRECISION)

    lbl = label_ref[0]                                           # (TR, W) int32

    # --- softmax CE + top-1 over the class axis; class loop is statically
    #     unrolled, every op is a plain 2-D (TR, W) elementwise op ---
    m = x[0:TR]
    for c in range(1, C):
        m = jnp.maximum(m, x[c * TR:(c + 1) * TR])

    esum = jnp.zeros_like(m)
    tgt = jnp.zeros_like(m)
    pred = jnp.full_like(lbl, C)                     # running first-max argmax
    for c in range(C):
        xc = x[c * TR:(c + 1) * TR]
        esum = esum + jnp.exp(xc - m)
        tgt = tgt + jnp.where(lbl == c, xc, 0.0)
        pred = jnp.minimum(pred, jnp.where(xc == m, c, C))
    lse = jnp.log(esum) + m

    # ignore_index pixels and padded rows (label == -1) contribute zero loss;
    # they also never match pred (pred < C <= 255), matching mmseg accuracy.
    valid = (lbl != IGNORE_INDEX) & (lbl >= 0)
    loss_ref[...] = loss_ref[...] + jnp.where(valid, lse - tgt, 0.0)
    correct_ref[...] = correct_ref[...] + jnp.where(pred == lbl, 1.0, 0.0)


def cross_entropy_loss_forward(cls_score, label, *, loss_weight=1.0,
                               align_corners=False):
    """cls_score: (N, C, Hc, Wc) logits (NCHW, any float dtype)
       label:     (N, 1, H, W) integer class indices (255 = ignore)
       returns (loss_cls scalar, acc shape-(1,)) like the PyTorch module."""
    assert not align_corners, "align_corners=False path implemented"
    assert cls_score.ndim == 4 and label.ndim == 4
    N, C, Hc, Wc = map(int, cls_score.shape)
    H, W = int(label.shape[2]), int(label.shape[3])

    TR = _pick_rows_per_tile(C, W, H, NUM_SPLITS)
    chunk = NUM_SPLITS * TR
    H_pad = _round_up(H, chunk)
    r_half = H_pad // chunk            # row tiles handled by each split

    labels = label.reshape(N, H, W).astype(jnp.int32)
    if H_pad != H:                     # cheap int pad; logits are never padded
        labels = jnp.pad(labels, ((0, 0), (0, H_pad - H), (0, 0)),
                         constant_values=-1)

    a_h = np.zeros((H_pad, Hc), np.float32)
    a_h[:H] = _bilinear_weights_matrix(H, Hc)        # padded rows: zero weights
    a_w = _bilinear_weights_matrix(W, Wc).T          # (Wc, W)

    loss_parts, correct_parts = pl.pallas_call(
        _fused_resize_ce_kernel,
        out_shape=(jax.ShapeDtypeStruct((NUM_SPLITS * TR, W), jnp.float32),
                   jax.ShapeDtypeStruct((NUM_SPLITS * TR, W), jnp.float32)),
        grid_spec=pltpu.PrefetchScalarGridSpec(
            num_scalar_prefetch=0,
            grid=(NUM_SPLITS, N, r_half),
            in_specs=[
                # small logits: full image per batch, native dtype, re-DMA'd
                # only when the batch index changes.
                pl.BlockSpec((1, C, Hc, Wc), lambda s, n, r: (n, 0, 0, 0)),
                # per-row-tile height interpolation weights
                pl.BlockSpec((TR, Hc), lambda s, n, r: (s * r_half + r, 0)),
                # shared width interpolation matrix (constant block)
                pl.BlockSpec((Wc, W), lambda s, n, r: (0, 0)),
                # labels for this row tile
                pl.BlockSpec((1, TR, W), lambda s, n, r: (n, s * r_half + r, 0)),
            ],
            out_specs=[
                pl.BlockSpec((TR, W), lambda s, n, r: (s, 0)),
                pl.BlockSpec((TR, W), lambda s, n, r: (s, 0)),
            ],
        ),
        compiler_params=pltpu.CompilerParams(
            dimension_semantics=("parallel", "arbitrary", "arbitrary"),
            vmem_limit_bytes=_VMEM_LIMIT_BYTES),
    )(cls_score, jnp.asarray(a_h), jnp.asarray(a_w), labels)

    P = N * H * W
    # padded rows and every split block are exact zeros where unused, so a
    # plain sum of the tiny partial arrays is correct.
    loss_sum = jnp.sum(loss_parts)
    correct_sum = jnp.sum(correct_parts)

    loss_cls = loss_weight * (loss_sum / P)          # reduction='mean'
    acc = (correct_sum * (100.0 / P)).reshape(1)     # mmseg accuracy, percent
    return loss_cls, acc


if __name__ == "__main__":
    key = jax.random.PRNGKey(0)
    k1, k2 = jax.random.split(key)

    N, C, Hc, Wc = 2, 4, 8, 8          # logits at lower resolution (NCHW)
    H, W = 16, 16                      # label resolution

    # Logits quantized to multiples of 1/4: with 2x upsampling the bilinear
    # weights are {0, .25, .75, 1}, so every interpolation stage is exact under
    # ANY MXU precision (1-pass bf16, bf16x3 or full f32) — the self-check
    # below is therefore independent of Mosaic's matmul precision defaults.
    raw = jax.random.normal(k1, (N, C, Hc, Wc), dtype=jnp.float32)
    cls_score = jnp.round(raw * 4.0) / 4.0
    label = jax.random.randint(k2, (N, 1, H, W), 0, C, dtype=jnp.int32)
    label = label.at[:, :, :2, :].set(IGNORE_INDEX)   # exercise ignore_index

    loss, acc = cross_entropy_loss_forward(cls_score, label)
    jax.block_until_ready((loss, acc))

    # ---- pure-JAX reference: exact 2-term half-pixel bilinear + CE + top-1 ----
    def _src(out_size, in_size):
        s = (np.arange(out_size, dtype=np.float64) + 0.5) * (in_size / out_size) - 0.5
        s = np.clip(s, 0.0, in_size - 1)
        lo = np.minimum(np.floor(s).astype(np.int64), in_size - 1)
        hi = np.minimum(lo + 1, in_size - 1)
        w = (s - lo).astype(np.float32)
        return lo, hi, w

    ylo, yhi, wy = _src(H, Hc)
    xlo, xhi, wx = _src(W, Wc)
    wy4 = wy[None, None, :, None]
    wx4 = wx[None, None, None, :]
    rows = cls_score[:, :, ylo, :] * (1.0 - wy4) + cls_score[:, :, yhi, :] * wy4
    resized = rows[:, :, :, xlo] * (1.0 - wx4) + rows[:, :, :, xhi] * wx4

    logits2d = jnp.transpose(resized, (0, 2, 3, 1)).reshape(-1, C)
    lbl = label.reshape(-1)
    valid = lbl != IGNORE_INDEX
    lse = jax.scipy.special.logsumexp(logits2d, axis=-1)
    tgt = jnp.take_along_axis(
        logits2d, jnp.clip(lbl, 0, C - 1)[:, None], axis=-1)[:, 0]
    ref_loss = jnp.sum(jnp.where(valid, lse - tgt, 0.0)) / lbl.shape[0]
    ref_acc = 100.0 * jnp.mean((jnp.argmax(logits2d, -1) == lbl).astype(jnp.float32))

    assert jnp.allclose(loss, ref_loss, rtol=1e-5, atol=1e-5), (loss, ref_loss)
    assert jnp.allclose(acc[0], ref_acc, rtol=1e-5, atol=1e-4), (acc, ref_acc)

    print("KERNEL_OK")
</pallas_src>

<mosaic_0001>
module attributes {stable_mosaic.version = 11 : i64} {
  func.func @_fused_resize_ce_kernel(%arg0: i32, %arg1: i32, %arg2: i32, %arg3: memref<1x4x8x8xf32, #tpu.memory_space<vmem>>, %arg4: memref<8x8xf32, #tpu.memory_space<vmem>>, %arg5: memref<8x16xf32, #tpu.memory_space<vmem>>, %arg6: memref<1x8x16xi32, #tpu.memory_space<vmem>>, %arg7: memref<8x16xf32, #tpu.memory_space<vmem>>, %arg8: memref<8x16xf32, #tpu.memory_space<vmem>>) attributes {dimension_semantics = [#tpu.dimension_semantics<parallel>, #tpu.dimension_semantics<arbitrary>, #tpu.dimension_semantics<arbitrary>], iteration_bounds = array<i64: 2, 2, 1>, scalar_prefetch = 0 : i64, scratch_operands = 0 : i64, tpu.core_type = #tpu.core_type<tc>, window_params = [{transform_indices = @transform_0, window_bounds = array<i64: 1, 4, 8, 8>}, {transform_indices = @transform_1, window_bounds = array<i64: 8, 8>}, {pipeline_mode = #tpu.pipeline_mode<synchronous>, transform_indices = @transform_2, window_bounds = array<i64: 8, 16>}, {transform_indices = @transform_3, window_bounds = array<i64: 1, 8, 16>}, {transform_indices = @transform_4, window_bounds = array<i64: 8, 16>}, {transform_indices = @transform_5, window_bounds = array<i64: 8, 16>}]} {
    %c0_i32 = arith.constant 0 : i32
    %0 = arith.cmpi eq, %arg1, %c0_i32 : i32
    %c0_i32_0 = arith.constant 0 : i32
    %1 = arith.cmpi eq, %arg2, %c0_i32_0 : i32
    %2 = arith.andi %0, %1 : i1
    %3 = arith.extui %2 : i1 to i32
    %c0_i32_1 = arith.constant 0 : i32
    %4 = arith.cmpi ne, %3, %c0_i32_1 : i32
    scf.if %4 {
      %cst_40 = arith.constant 0.000000e+00 : f32
      %103 = vector.broadcast %cst_40 : f32 to vector<8x16xf32>
      %c0_41 = arith.constant 0 : index
      %c0_42 = arith.constant 0 : index
      %104 = vector.load %arg7[%c0_41, %c0_42] : memref<8x16xf32, #tpu.memory_space<vmem>>, vector<8x16xf32>
      tpu.vector_store %arg7[%c0_41, %c0_42], %103 {strides = array<i32>} : memref<8x16xf32, #tpu.memory_space<vmem>>, vector<8x16xf32>,
      %cst_43 = arith.constant 0.000000e+00 : f32
      %105 = vector.broadcast %cst_43 : f32 to vector<8x16xf32>
      %c0_44 = arith.constant 0 : index
      %c0_45 = arith.constant 0 : index
      %106 = vector.load %arg8[%c0_44, %c0_45] : memref<8x16xf32, #tpu.memory_space<vmem>>, vector<8x16xf32>
      tpu.vector_store %arg8[%c0_44, %c0_45], %105 {strides = array<i32>} : memref<8x16xf32, #tpu.memory_space<vmem>>, vector<8x16xf32>,
    } else {
    }
    %c0 = arith.constant 0 : index
    %c0_2 = arith.constant 0 : index
    %c0_3 = arith.constant 0 : index
    %c0_4 = arith.constant 0 : index
    %5 = vector.load %arg3[%c0, %c0_2, %c0_3, %c0_4] : memref<1x4x8x8xf32, #tpu.memory_space<vmem>>, vector<1x4x8x8xf32>
    %6 = vector.shape_cast %5 : vector<1x4x8x8xf32> to vector<4x8x8xf32>
    %c0_5 = arith.constant 0 : index
    %c0_6 = arith.constant 0 : index
    %7 = vector.load %arg4[%c0_5, %c0_6] : memref<8x8xf32, #tpu.memory_space<vmem>>, vector<8x8xf32>
    %c0_7 = arith.constant 0 : index
    %c0_8 = arith.constant 0 : index
    %8 = vector.load %arg5[%c0_7, %c0_8] : memref<8x16xf32, #tpu.memory_space<vmem>>, vector<8x16xf32>
    %9 = vector.shape_cast %7 : vector<8x8xf32> to vector<1x8x8xf32>
    %10 = vector.shape_cast %9 : vector<1x8x8xf32> to vector<1x8x8xf32>
    %11 = vector.broadcast %10 : vector<1x8x8xf32> to vector<4x8x8xf32>
    %cst = arith.constant dense<0.000000e+00> : vector<4x8x8xf32>
    %12 = tpu.matmul %11, %6, %cst {dimension_numbers = #tpu.dot_dimension_numbers<[2], [1], [1], [2], [0, 0, 0, 1, 1, 2], [0], [0]>} : vector<4x8x8xf32>, vector<4x8x8xf32>, vector<4x8x8xf32> -> vector<4x8x8xf32>
    %13 = vector.shape_cast %12 : vector<4x8x8xf32> to vector<32x8xf32>
    %cst_9 = arith.constant dense<0.000000e+00> : vector<32x16xf32>
    %14 = tpu.matmul %13, %8, %cst_9 {dimension_numbers = #tpu.dot_dimension_numbers<[1], [0], [0], [1], [0, 0, 1, 1], [], []>} : vector<32x8xf32>, vector<8x16xf32>, vector<32x16xf32> -> vector<32x16xf32>
    %c0_10 = arith.constant 0 : index
    %c0_11 = arith.constant 0 : index
    %c0_12 = arith.constant 0 : index
    %15 = vector.load %arg6[%c0_10, %c0_11, %c0_12] : memref<1x8x16xi32, #tpu.memory_space<vmem>>, vector<1x8x16xi32>
    %16 = vector.shape_cast %15 : vector<1x8x16xi32> to vector<8x16xi32>
    %17 = vector.extract_strided_slice %14 {offsets = [0, 0], sizes = [8, 16], strides = [1, 1]} : vector<32x16xf32> to vector<8x16xf32>
    %18 = vector.extract_strided_slice %14 {offsets = [8, 0], sizes = [8, 16], strides = [1, 1]} : vector<32x16xf32> to vector<8x16xf32>
    %19 = arith.maximumf %17, %18 : vector<8x16xf32>
    %20 = vector.extract_strided_slice %14 {offsets = [16, 0], sizes = [8, 16], strides = [1, 1]} : vector<32x16xf32> to vector<8x16xf32>
    %21 = arith.maximumf %19, %20 : vector<8x16xf32>
    %22 = vector.extract_strided_slice %14 {offsets = [24, 0], sizes = [8, 16], strides = [1, 1]} : vector<32x16xf32> to vector<8x16xf32>
    %23 = arith.maximumf %21, %22 : vector<8x16xf32>
    %cst_13 = arith.constant 0.000000e+00 : f32
    %24 = vector.broadcast %cst_13 : f32 to vector<8x16xf32>
    %cst_14 = arith.constant 0.000000e+00 : f32
    %25 = vector.broadcast %cst_14 : f32 to vector<8x16xf32>
    %c4_i32 = arith.constant 4 : i32
    %26 = vector.broadcast %c4_i32 : i32 to vector<8x16xi32>
    %27 = vector.extract_strided_slice %14 {offsets = [0, 0], sizes = [8, 16], strides = [1, 1]} : vector<32x16xf32> to vector<8x16xf32>
    %28 = arith.subf %27, %23 : vector<8x16xf32>
    %29 = math.exp %28 : vector<8x16xf32>
    %30 = arith.addf %24, %29 : vector<8x16xf32>
    %c0_i32_15 = arith.constant 0 : i32
    %31 = vector.broadcast %c0_i32_15 : i32 to vector<8x16xi32>
    %32 = arith.cmpi eq, %16, %31 : vector<8x16xi32>
    %cst_16 = arith.constant 0.000000e+00 : f32
    %33 = vector.broadcast %cst_16 : f32 to vector<8x16xf32>
    %34 = arith.select %32, %27, %33 : vector<8x16xi1>, vector<8x16xf32>
    %35 = arith.addf %25, %34 : vector<8x16xf32>
    %36 = arith.cmpf oeq, %27, %23 : vector<8x16xf32>
    %c0_i32_17 = arith.constant 0 : i32
    %c4_i32_18 = arith.constant 4 : i32
    %37 = vector.broadcast %c0_i32_17 : i32 to vector<8x16xi32>
    %38 = vector.broadcast %c4_i32_18 : i32 to vector<8x16xi32>
    %39 = arith.select %36, %37, %38 : vector<8x16xi1>, vector<8x16xi32>
    %40 = arith.minsi %26, %39 : vector<8x16xi32>
    %41 = vector.extract_strided_slice %14 {offsets = [8, 0], sizes = [8, 16], strides = [1, 1]} : vector<32x16xf32> to vector<8x16xf32>
    %42 = arith.subf %41, %23 : vector<8x16xf32>
    %43 = math.exp %42 : vector<8x16xf32>
    %44 = arith.addf %30, %43 : vector<8x16xf32>
    %c1_i32 = arith.constant 1 : i32
    %45 = vector.broadcast %c1_i32 : i32 to vector<8x16xi32>
    %46 = arith.cmpi eq, %16, %45 : vector<8x16xi32>
    %cst_19 = arith.constant 0.000000e+00 : f32
    %47 = vector.broadcast %cst_19 : f32 to vector<8x16xf32>
    %48 = arith.select %46, %41, %47 : vector<8x16xi1>, vector<8x16xf32>
    %49 = arith.addf %35, %48 : vector<8x16xf32>
    %50 = arith.cmpf oeq, %41, %23 : vector<8x16xf32>
    %c1_i32_20 = arith.constant 1 : i32
    %c4_i32_21 = arith.constant 4 : i32
    %51 = vector.broadcast %c1_i32_20 : i32 to vector<8x16xi32>
    %52 = vector.broadcast %c4_i32_21 : i32 to vector<8x16xi32>
    %53 = arith.select %50, %51, %52 : vector<8x16xi1>, vector<8x16xi32>
    %54 = arith.minsi %40, %53 : vector<8x16xi32>
    %55 = vector.extract_strided_slice %14 {offsets = [16, 0], sizes = [8, 16], strides = [1, 1]} : vector<32x16xf32> to vector<8x16xf32>
    %56 = arith.subf %55, %23 : vector<8x16xf32>
    %57 = math.exp %56 : vector<8x16xf32>
    %58 = arith.addf %44, %57 : vector<8x16xf32>
    %c2_i32 = arith.constant 2 : i32
    %59 = vector.broadcast %c2_i32 : i32 to vector<8x16xi32>
    %60 = arith.cmpi eq, %16, %59 : vector<8x16xi32>
    %cst_22 = arith.constant 0.000000e+00 : f32
    %61 = vector.broadcast %cst_22 : f32 to vector<8x16xf32>
    %62 = arith.select %60, %55, %61 : vector<8x16xi1>, vector<8x16xf32>
    %63 = arith.addf %49, %62 : vector<8x16xf32>
    %64 = arith.cmpf oeq, %55, %23 : vector<8x16xf32>
    %c2_i32_23 = arith.constant 2 : i32
    %c4_i32_24 = arith.constant 4 : i32
    %65 = vector.broadcast %c2_i32_23 : i32 to vector<8x16xi32>
    %66 = vector.broadcast %c4_i32_24 : i32 to vector<8x16xi32>
    %67 = arith.select %64, %65, %66 : vector<8x16xi1>, vector<8x16xi32>
    %68 = arith.minsi %54, %67 : vector<8x16xi32>
    %69 = vector.extract_strided_slice %14 {offsets = [24, 0], sizes = [8, 16], strides = [1, 1]} : vector<32x16xf32> to vector<8x16xf32>
    %70 = arith.subf %69, %23 : vector<8x16xf32>
    %71 = math.exp %70 : vector<8x16xf32>
    %72 = arith.addf %58, %71 : vector<8x16xf32>
    %c3_i32 = arith.constant 3 : i32
    %73 = vector.broadcast %c3_i32 : i32 to vector<8x16xi32>
    %74 = arith.cmpi eq, %16, %73 : vector<8x16xi32>
    %cst_25 = arith.constant 0.000000e+00 : f32
    %75 = vector.broadcast %cst_25 : f32 to vector<8x16xf32>
    %76 = arith.select %74, %69, %75 : vector<8x16xi1>, vector<8x16xf32>
    %77 = arith.addf %63, %76 : vector<8x16xf32>
    %78 = arith.cmpf oeq, %69, %23 : vector<8x16xf32>
    %c3_i32_26 = arith.constant 3 : i32
    %c4_i32_27 = arith.constant 4 : i32
    %79 = vector.broadcast %c3_i32_26 : i32 to vector<8x16xi32>
    %80 = vector.broadcast %c4_i32_27 : i32 to vector<8x16xi32>
    %81 = arith.select %78, %79, %80 : vector<8x16xi1>, vector<8x16xi32>
    %82 = arith.minsi %68, %81 : vector<8x16xi32>
    %83 = math.log %72 : vector<8x16xf32>
    %84 = arith.addf %83, %23 : vector<8x16xf32>
    %c255_i32 = arith.constant 255 : i32
    %85 = vector.broadcast %c255_i32 : i32 to vector<8x16xi32>
    %86 = arith.cmpi ne, %16, %85 : vector<8x16xi32>
    %c0_i32_28 = arith.constant 0 : i32
    %87 = vector.broadcast %c0_i32_28 : i32 to vector<8x16xi32>
    %88 = arith.cmpi sge, %16, %87 : vector<8x16xi32>
    %89 = arith.andi %86, %88 : vector<8x16xi1>
    %c0_29 = arith.constant 0 : index
    %c0_30 = arith.constant 0 : index
    %90 = vector.load %arg7[%c0_29, %c0_30] : memref<8x16xf32, #tpu.memory_space<vmem>>, vector<8x16xf32>
    %91 = arith.subf %84, %77 : vector<8x16xf32>
    %cst_31 = arith.constant 0.000000e+00 : f32
    %92 = vector.broadcast %cst_31 : f32 to vector<8x16xf32>
    %93 = arith.select %89, %91, %92 : vector<8x16xi1>, vector<8x16xf32>
    %94 = arith.addf %90, %93 : vector<8x16xf32>
    %c0_32 = arith.constant 0 : index
    %c0_33 = arith.constant 0 : index
    %95 = vector.load %arg7[%c0_32, %c0_33] : memref<8x16xf32, #tpu.memory_space<vmem>>, vector<8x16xf32>
    tpu.vector_store %arg7[%c0_32, %c0_33], %94 {strides = array<i32>} : memref<8x16xf32, #tpu.memory_space<vmem>>, vector<8x16xf32>,
    %c0_34 = arith.constant 0 : index
    %c0_35 = arith.constant 0 : index
    %96 = vector.load %arg8[%c0_34, %c0_35] : memref<8x16xf32, #tpu.memory_space<vmem>>, vector<8x16xf32>
    %97 = arith.cmpi eq, %82, %16 : vector<8x16xi32>
    %cst_36 = arith.constant 1.000000e+00 : f32
    %cst_37 = arith.constant 0.000000e+00 : f32
    %98 = vector.broadcast %cst_36 : f32 to vector<8x16xf32>
    %99 = vector.broadcast %cst_37 : f32 to vector<8x16xf32>
    %100 = arith.select %97, %98, %99 : vector<8x16xi1>, vector<8x16xf32>
    %101 = arith.addf %96, %100 : vector<8x16xf32>
    %c0_38 = arith.constant 0 : index
    %c0_39 = arith.constant 0 : index
    %102 = vector.load %arg8[%c0_38, %c0_39] : memref<8x16xf32, #tpu.memory_space<vmem>>, vector<8x16xf32>
    tpu.vector_store %arg8[%c0_38, %c0_39], %101 {strides = array<i32>} : memref<8x16xf32, #tpu.memory_space<vmem>>, vector<8x16xf32>,
    return
  }
  func.func @transform_0(%arg0: i32, %arg1: i32, %arg2: i32) -> (i32, i32, i32, i32) {
    %c0_i32 = arith.constant 0 : i32
    %c0_i32_0 = arith.constant 0 : i32
    %c0_i32_1 = arith.constant 0 : i32
    %c0_i32_2 = arith.constant 0 : i32
    return %arg1, %c0_i32, %c0_i32_0, %c0_i32_1 : i32, i32, i32, i32
  }
  func.func @transform_1(%arg0: i32, %arg1: i32, %arg2: i32) -> (i32, i32) {
    %c1_i32 = arith.constant 1 : i32
    %0 = arith.muli %arg0, %c1_i32 : i32
    %1 = arith.addi %0, %arg2 : i32
    %c0_i32 = arith.constant 0 : i32
    %c0_i32_0 = arith.constant 0 : i32
    return %1, %c0_i32 : i32, i32
  }
  func.func @transform_2(%arg0: i32, %arg1: i32, %arg2: i32) -> (i32, i32) {
    %c0_i32 = arith.constant 0 : i32
    %c0_i32_0 = arith.constant 0 : i32
    %c0_i32_1 = arith.constant 0 : i32
    return %c0_i32, %c0_i32_0 : i32, i32
  }
  func.func @transform_3(%arg0: i32, %arg1: i32, %arg2: i32) -> (i32, i32, i32) {
    %c1_i32 = arith.constant 1 : i32
    %0 = arith.muli %arg0, %c1_i32 : i32
    %1 = arith.addi %0, %arg2 : i32
    %c0_i32 = arith.constant 0 : i32
    %c0_i32_0 = arith.constant 0 : i32
    return %arg1, %1, %c0_i32 : i32, i32, i32
  }
  func.func @transform_4(%arg0: i32, %arg1: i32, %arg2: i32) -> (i32, i32) {
    %c0_i32 = arith.constant 0 : i32
    %c0_i32_0 = arith.constant 0 : i32
    return %arg0, %c0_i32 : i32, i32
  }
  func.func @transform_5(%arg0: i32, %arg1: i32, %arg2: i32) -> (i32, i32) {
    %c0_i32 = arith.constant 0 : i32
    %c0_i32_0 = arith.constant 0 : i32
    return %arg0, %c0_i32 : i32, i32
  }
}

</mosaic_0001>

<llo_original>
// kernel: tpu_custom_call.1
$region0: #{tpu_custom_call.1}
  #allocation0 [shape = 'u32[]', space=smem, size = 0x4, offset = 0x4, fixed_abs, tag = 'smem constant byte address 0x4 - core index']
  #allocation1 [shape = 'u32[144,128]{1,0:T(1,128)}', space=vmem, size = 0x12000, scoped, tag = 'internal scratch']
  %s0 = inlined_call_operand.hbm [shape: f32[2,4,8,8], index: 0, kind: input, shape index: {}]
  %s1 = inlined_call_operand.vmem [shape: f32[16,8], index: 1, kind: input, shape index: {}]
  %s2 = inlined_call_operand.hbm [shape: f32[8,16], index: 2, kind: input, shape index: {}]
  %s3 = inlined_call_operand.vmem [shape: s32[2,16,16], index: 3, kind: input, shape index: {}]
  %s4 = inlined_call_operand.hbm [shape: f32[16,16], index: 4, kind: output, shape index: {0}]
  %s5 = inlined_call_operand.hbm [shape: f32[16,16], index: 5, kind: output, shape index: {1}]
  %6 = xla_tuple %s4, %s5
  %s7 = sld [smem:[#allocation0]]
  $region69: #{tpu_custom_call.1} parent=0
    _
  %s9 = ssub.s32 1, %s7
  %s10 = scalar_select 0, %s9, %s7
  $region1: #{tpu_custom_call.1} parent=0
    #allocation2 [shape = 'u8[32768]{0}', space=vmem, size = 0x8000, scoped, tag = 'input window, operand 0']
    #allocation3 [shape = 's32[2]{0}', space=sflag, size = 0x8, scoped, tag = 'scoped memory for tpu_custom_call.1']
    #allocation4 [shape = 's32[2]{0}', space=sflag, size = 0x8, scoped, tag = 'scoped memory for tpu_custom_call.1']
    #allocation5 [shape = 'u8[4096]{0}', space=vmem, size = 0x1000, scoped, tag = 'input window, operand 2, single buffered']
    #allocation6 [shape = 's32[1]{0}', space=sflag, size = 0x4, scoped, tag = 'scoped memory for tpu_custom_call.1']
    #allocation7 [shape = 'u8[8192]{0}', space=vmem, size = 0x2000, scoped, tag = 'output window, operand 0']
    #allocation8 [shape = 'u8[8192]{0}', space=vmem, size = 0x2000, scoped, tag = 'output window, operand 1']
    #allocation9 [shape = 's32[2]{0}', space=sflag, size = 0x8, scoped, tag = 'scoped memory for tpu_custom_call.1']
    %11 = vsyncpa [#allocation3], 0
    %s12 = scalar_lea.sflag [#allocation3], 1
    %13 = vsyncpa %s12, 0
    %14 = vsyncpa [#allocation6], 0
    %15 = vsyncpa [#allocation4], 0
    %s16 = scalar_lea.sflag [#allocation4], 1
    %17 = vsyncpa %s16, 0
    %18 = vsyncpa [#allocation9], 0
    %s19 = scalar_lea.sflag [#allocation9], 1
    %20 = vsyncpa %s19, 0
    loop: start=0, step=1, limit=6
    $region2: #{tpu_custom_call.1} parent=1 // loop_pre_header
      _
    $region3: #{tpu_custom_call.1} parent=1 // loop_header
      %s22 = sphi 0, %s26
      %p23 = scmp.ge.s32.totalorder %s22, 6
      %s29 = sphi 0, %s48
      %s30 = sphi 0, %s44
      %s31 = sphi 0, %s40
      %s32 = sphi 0, %s29
      %s33 = sphi 0, %s30
      %s34 = sphi 0, %s31
      %s35 = sphi 0, %s32
      %s36 = sphi 0, %s33
      %s37 = sphi 0, %s34
      %s51 = sphi 0, %s53
      %s54 = sphi 0, %s51
      %s55 = sphi 0, %s54
      %s71 = sphi 0, %s55
      %s79 = sphi 0, %s81
      %s82 = sphi 0, %s79
      %s83 = sphi 0, %s82
      %s99 = sphi 0, %s83
      %s103 = sphi 0, %s103
      %s105 = sphi 0, %s103
      %s106 = sphi 0, %s105
      %s120 = sphi 0, %s106
      %s130 = sphi 0, %s132
      %s133 = sphi 0, %s130
      %s134 = sphi 0, %s133
      %s150 = sphi 0, %s134
      %s156 = sphi 0, %s158
      %s159 = sphi 0, %s156
      %s160 = sphi 0, %s159
      %s176 = sphi 0, %s160
      %s182 = sphi 0, %s184
      %s185 = sphi 0, %s182
      %s186 = sphi 0, %s185
      %s202 = sphi 0, %s186
    $region4: #{tpu_custom_call.1} parent=1 // loop_header_branch
      %25 = sbr.rel (%p23) target = $region8
    $region5: #{tpu_custom_call.1} parent=1 // loop_body
      %s27 = ssub.s32 %s22, 1
      %s28 = ssub.s32 %s22, 2
      %s38 = sadd.s32 1, %s31
      %p39 = scmp.ge.s32.totalorder %s38, 1
      %s40 = scalar_select %p39, 0, %s38
      %s41 = sadd.s32 1, %s30
      %s42 = scalar_select %p39, %s41, %s30
      %p43 = scmp.ge.s32.totalorder %s42, 2
      %s44 = scalar_select %p43, 0, %s42
      %s45 = sadd.s32 1, %s29
      %s46 = scalar_select %p43, %s45, %s29
      %p47 = scmp.ge.s32.totalorder %s46, 2
      %s48 = scalar_select %p47, 0, %s46
      %s49 = ssub.s32 %s30, %s44
      %p50 = scmp.eq.s32.totalorder %s49, 0
      %s52 = sadd.s32 %s51, 1
      %s53 = scalar_select %p50, %s51, %s52
      %p56 = pneg %p50
      %p57 = scmp.eq.s32.totalorder %s22, 3
      %p58 = por %p56, %p57
      %p59 = scmp.ne.s32.totalorder %s51, %s54
      %p60 = scmp.eq.s32.totalorder %s22, 0
      %p61 = por %p59, %p60
      %p62 = scmp.ne.s32.totalorder %s51, %s54
      %p63 = scmp.eq.s32.totalorder %s27, 3
      %p64 = por %p62, %p63
      %p65 = scmp.ne.s32.totalorder %s54, %s55
      %p66 = scmp.eq.s32.totalorder %s27, 0
      %p67 = por %p65, %p66
      %p68 = scmp.ne.s32.totalorder %s54, %s55
      %p69 = scmp.eq.s32.totalorder %s28, 3
      %p70 = por %p68, %p69
      %p72 = scmp.ne.s32.totalorder %s55, %s71
      %p73 = scmp.eq.s32.totalorder %s28, 0
      %p74 = por %p72, %p73
      %s75 = sadd.s32 %s29, %s31
      %s76 = sadd.s32 %s48, %s40
      %s77 = ssub.s32 %s75, %s76
      %p78 = scmp.eq.s32.totalorder %s77, 0
      %s80 = sadd.s32 %s79, 1
      %s81 = scalar_select %p78, %s79, %s80
      %p84 = pneg %p78
      %p85 = scmp.eq.s32.totalorder %s22, 3
      %p86 = por %p84, %p85
      %p87 = scmp.ne.s32.totalorder %s79, %s82
      %p88 = scmp.eq.s32.totalorder %s22, 0
      %p89 = por %p87, %p88
      %p90 = scmp.ne.s32.totalorder %s79, %s82
      %p91 = scmp.eq.s32.totalorder %s27, 3
      %p92 = por %p90, %p91
      %p93 = scmp.ne.s32.totalorder %s82, %s83
      %p94 = scmp.eq.s32.totalorder %s27, 0
      %p95 = por %p93, %p94
      %p96 = scmp.ne.s32.totalorder %s82, %s83
      %p97 = scmp.eq.s32.totalorder %s28, 3
      %p98 = por %p96, %p97
      %p100 = scmp.ne.s32.totalorder %s83, %s99
      %p101 = scmp.eq.s32.totalorder %s28, 0
      %p102 = por %p100, %p101
      %s104 = sadd.s32 %s103, 1
      %p107 = scmp.eq.s32.totalorder %s22, 3
      %p108 = scmp.ne.s32.totalorder %s103, %s105
      %p109 = scmp.eq.s32.totalorder %s22, 0
      %p110 = por %p108, %p109
      %p111 = scmp.ne.s32.totalorder %s103, %s105
      %p112 = scmp.eq.s32.totalorder %s27, 3
      %p113 = por %p111, %p112
      %p114 = scmp.ne.s32.totalorder %s105, %s106
      %p115 = scmp.eq.s32.totalorder %s27, 0
      %p116 = por %p114, %p115
      %p117 = scmp.ne.s32.totalorder %s105, %s106
      %p118 = scmp.eq.s32.totalorder %s28, 3
      %p119 = por %p117, %p118
      %p121 = scmp.ne.s32.totalorder %s106, %s120
      %p122 = scmp.eq.s32.totalorder %s28, 0
      %p123 = por %p121, %p122
      %s124 = sadd.s32 %s29, %s31
      %s125 = sadd.s32 %s48, %s40
      %s126 = ssub.s32 %s30, %s44
      %s127 = ssub.s32 %s124, %s125
      %s128 = sor.u32 %s126, %s127
      %p129 = scmp.eq.s32.totalorder %s128, 0
      %s131 = sadd.s32 %s130, 1
      %s132 = scalar_select %p129, %s130, %s131
      %p135 = pneg %p129
      %p136 = scmp.eq.s32.totalorder %s22, 3
      %p137 = por %p135, %p136
      %p138 = scmp.ne.s32.totalorder %s130, %s133
      %p139 = scmp.eq.s32.totalorder %s22, 0
      %p140 = por %p138, %p139
      %p141 = scmp.ne.s32.totalorder %s130, %s133
      %p142 = scmp.eq.s32.totalorder %s27, 3
      %p143 = por %p141, %p142
      %p144 = scmp.ne.s32.totalorder %s133, %s134
      %p145 = scmp.eq.s32.totalorder %s27, 0
      %p146 = por %p144, %p145
      %p147 = scmp.ne.s32.totalorder %s133, %s134
      %p148 = scmp.eq.s32.totalorder %s28, 3
      %p149 = por %p147, %p148
      %p151 = scmp.ne.s32.totalorder %s134, %s150
      %p152 = scmp.eq.s32.totalorder %s28, 0
      %p153 = por %p151, %p152
      %s154 = ssub.s32 %s29, %s48
      %p155 = scmp.eq.s32.totalorder %s154, 0
      %s157 = sadd.s32 %s156, 1
      %s158 = scalar_select %p155, %s156, %s157
      %p161 = pneg %p155
      %p162 = scmp.eq.s32.totalorder %s22, 3
      %p163 = por %p161, %p162
      %p164 = scmp.ne.s32.totalorder %s156, %s159
      %p165 = scmp.eq.s32.totalorder %s22, 0
      %p166 = por %p164, %p165
      %p167 = scmp.ne.s32.totalorder %s156, %s159
      %p168 = scmp.eq.s32.totalorder %s27, 3
      %p169 = por %p167, %p168
      %p170 = scmp.ne.s32.totalorder %s159, %s160
      %p171 = scmp.eq.s32.totalorder %s27, 0
      %p172 = por %p170, %p171
      %p173 = scmp.ne.s32.totalorder %s159, %s160
      %p174 = scmp.eq.s32.totalorder %s28, 3
      %p175 = por %p173, %p174
      %p177 = scmp.ne.s32.totalorder %s160, %s176
      %p178 = scmp.eq.s32.totalorder %s28, 0
      %p179 = por %p177, %p178
      %s180 = ssub.s32 %s29, %s48
      %p181 = scmp.eq.s32.totalorder %s180, 0
      %s183 = sadd.s32 %s182, 1
      %s184 = scalar_select %p181, %s182, %s183
      %p187 = pneg %p181
      %p188 = scmp.eq.s32.totalorder %s22, 3
      %p189 = por %p187, %p188
      %p190 = scmp.ne.s32.totalorder %s182, %s185
      %p191 = scmp.eq.s32.totalorder %s22, 0
      %p192 = por %p190, %p191
      %p193 = scmp.ne.s32.totalorder %s182, %s185
      %p194 = scmp.eq.s32.totalorder %s27, 3
      %p195 = por %p193, %p194
      %p196 = scmp.ne.s32.totalorder %s185, %s186
      %p197 = scmp.eq.s32.totalorder %s27, 0
      %p198 = por %p196, %p197
      %p199 = scmp.ne.s32.totalorder %s185, %s186
      %p200 = scmp.eq.s32.totalorder %s28, 3
      %p201 = por %p199, %p200
      %p203 = scmp.ne.s32.totalorder %s186, %s202
      %p204 = scmp.eq.s32.totalorder %s28, 0
      %p205 = por %p203, %p204
      %p206 = scmp.le.s32.totalorder 1, %s22
      %p207 = scmp.lt.s32.totalorder %s22, 5
      %p208 = pnand %p206, %p207
      %p209 = pneg %p208
      // Predicated region
      $region9: #{tpu_custom_call.1} parent=5 // pred_check
        _
      $region10: #{tpu_custom_call.1} parent=5 // pred_check_branch
        %211 = sbr.rel (%p208) target = $region12
      $region11: #{tpu_custom_call.1} parent=5 // pred_region
        %s212 = ssub.s32 %s22, 1
        // Predicated region
        $region13: #{tpu_custom_call.1} parent=11 // pred_check
          %p213 = pneg %p116
        $region14: #{tpu_custom_call.1} parent=11 // pred_check_branch
          %215 = sbr.rel (%p213) target = $region16
        $region15: #{tpu_custom_call.1} parent=11 // pred_region
          %s217 = ssub.s32 128, 128
          %218 = vsyncadd [#allocation6], %s217
          %s220 = sshll.u32 [#allocation5], 4
          %s221 = int_to_ptr.vmem [resolvable:$true] %s220
          %223 = dma.hbm_to_vmem [thread:$0]  %s2, 128, %s221, [#allocation6]
        $region16: #{tpu_custom_call.1} parent=11 // pred_fallthru
          _
      $region12: #{tpu_custom_call.1} parent=5 // pred_fallthru
        _
      %p224 = scmp.lt.s32.totalorder %s22, 4
      // Predicated region
      $region17: #{tpu_custom_call.1} parent=5 // pred_check
        %p225 = pneg %p224
      $region18: #{tpu_custom_call.1} parent=5 // pred_check_branch
        %227 = sbr.rel (%p225) target = $region20
      $region19: #{tpu_custom_call.1} parent=5 // pred_region
        // Predicated region
        $region21: #{tpu_custom_call.1} parent=19 // pred_check
          %p228 = pneg %p61
        $region22: #{tpu_custom_call.1} parent=19 // pred_check_branch
          %230 = sbr.rel (%p228) target = $region24
        $region23: #{tpu_custom_call.1} parent=19 // pred_region
          %s231 = sand.u32 %s51, 1
          %s232 = scalar_lea.sflag [#allocation3], %s231
          %s233 = sand.u32 %s51, 1
          %s234 = smul.addr %s233, 32
          %s235 = scalar_lea.vmem [#allocation2], %s234
          %s237 = ssub.s32 512, 512
          %238 = vsyncadd %s232, %s237
          %s239 = smul.addr %s30, 4
          %s240 = smul.addr %s239, 128
          %s241 = scalar_lea.hbm %s0, %s240
          %s242 = sshll.u32 %s235, 4
          %s243 = int_to_ptr.vmem [resolvable:$true] %s242
          %248 = dma.hbm_to_vmem [thread:$0]  %s241, 512, %s243, %s232, 128, 128, 8
        $region24: #{tpu_custom_call.1} parent=19 // pred_fallthru
          _
        // Predicated region
        $region25: #{tpu_custom_call.1} parent=19 // pred_check
          %p249 = pneg %p89
        $region26: #{tpu_custom_call.1} parent=19 // pred_check_branch
          %251 = sbr.rel (%p249) target = $region28
        $region27: #{tpu_custom_call.1} parent=19 // pred_region
          %s252 = sadd.s32 %s29, %s31
          %p253 = scmp.lt.s32.totalorder %s252, 1
          %s254 = scalar_select %p253, %s252, 1
          %s255 = smul.addr %s254, 8
          %s256 = scalar_lea.vmem %s1, %s255
          %s257 = sadd.s32 %s29, %s31
        $region28: #{tpu_custom_call.1} parent=19 // pred_fallthru
          _
        // Predicated region
        $region29: #{tpu_custom_call.1} parent=19 // pred_check
          %p258 = pneg %p140
        $region30: #{tpu_custom_call.1} parent=19 // pred_check_branch
          %260 = sbr.rel (%p258) target = $region32
        $region31: #{tpu_custom_call.1} parent=19 // pred_region
          %s261 = sadd.s32 %s29, %s31
          %p262 = scmp.lt.s32.totalorder %s30, 1
          %s263 = scalar_select %p262, %s30, 1
          %p264 = scmp.lt.s32.totalorder %s261, 1
          %s265 = scalar_select %p264, %s261, 1
          %s266 = smul.addr %s263, 2
          %s267 = sadd.s32 %s265, %s266
          %s268 = smul.addr %s267, 8
          %s269 = scalar_lea.vmem %s3, %s268
          %s270 = sadd.s32 %s29, %s31
        $region32: #{tpu_custom_call.1} parent=19 // pred_fallthru
          _
      $region20: #{tpu_custom_call.1} parent=5 // pred_fallthru
        _
      %p271 = scmp.le.s32.totalorder 1, %s22
      %p272 = scmp.lt.s32.totalorder %s22, 5
      %p273 = pnand %p271, %p272
      %p274 = pneg %p273
      // Predicated region
      $region33: #{tpu_custom_call.1} parent=5 // pred_check
        _
      $region34: #{tpu_custom_call.1} parent=5 // pred_check_branch
        %276 = sbr.rel (%p273) target = $region36
      $region35: #{tpu_custom_call.1} parent=5 // pred_region
        %s277 = ssub.s32 %s22, 1
        %s278 = sand.u32 %s54, 1
        %s279 = scalar_lea.sflag [#allocation3], %s278
        %s280 = sand.u32 %s54, 1
        %s281 = smul.addr %s280, 32
        %s282 = scalar_lea.vmem [#allocation2], %s281
        // Predicated region
        $region37: #{tpu_custom_call.1} parent=35 // pred_check
          %p283 = pneg %p67
        $region38: #{tpu_custom_call.1} parent=35 // pred_check_branch
          %285 = sbr.rel (%p283) target = $region40
        $region39: #{tpu_custom_call.1} parent=35 // pred_region
          %286 = dma.done %s279, 512
        $region40: #{tpu_custom_call.1} parent=35 // pred_fallthru
          _
        // Predicated region
        $region41: #{tpu_custom_call.1} parent=35 // pred_check
          %p287 = pneg %p116
        $region42: #{tpu_custom_call.1} parent=35 // pred_check_branch
          %289 = sbr.rel (%p287) target = $region44
        $region43: #{tpu_custom_call.1} parent=35 // pred_region
          %290 = dma.done [#allocation6], 128
        $region44: #{tpu_custom_call.1} parent=35 // pred_fallthru
          _
        %s291 = sand.u32 %s54, 1
        %s292 = scalar_lea.sflag [#allocation3], %s291
        %s293 = sand.u32 %s54, 1
        %s294 = smul.addr %s293, 32
        %s295 = scalar_lea.vmem [#allocation2], %s294
        %p296 = pneg %p67
        %p297 = pneg %p64
        %s298 = sadd.s32 %s32, %s34
        %p299 = scmp.lt.s32.totalorder %s298, 1
        %s300 = scalar_select %p299, %s298, 1
        %s301 = smul.addr %s300, 8
        %s302 = scalar_lea.vmem %s1, %s301
        %p303 = pneg %p95
        %p304 = pneg %p92
        %p305 = pneg %p116
        %p306 = pneg %p113
        %s307 = sadd.s32 %s32, %s34
        %p308 = scmp.lt.s32.totalorder %s33, 1
        %s309 = scalar_select %p308, %s33, 1
        %p310 = scmp.lt.s32.totalorder %s307, 1
        %s311 = scalar_select %p310, %s307, 1
        %s312 = smul.addr %s309, 2
        %s313 = sadd.s32 %s311, %s312
        %s314 = smul.addr %s313, 8
        %s315 = scalar_lea.vmem %s3, %s314
        %p316 = pneg %p146
        %p317 = pneg %p143
        %p318 = pneg %p172
        %p319 = pneg %p169
        %s320 = sand.u32 %s159, 1
        %s321 = scalar_lea.sflag [#allocation4], %s320
        %s322 = sand.u32 %s159, 1
        %s323 = smul.addr %s322, 8
        %s324 = scalar_lea.vmem [#allocation7], %s323
        %p325 = pneg %p198
        %p326 = pneg %p195
        %s327 = sand.u32 %s185, 1
        %s328 = scalar_lea.sflag [#allocation9], %s327
        %s329 = sand.u32 %s185, 1
        %s330 = smul.addr %s329, 8
        %s331 = scalar_lea.vmem [#allocation8], %s330
        %s332 = sadd.s32 %s32, %s34
        %p333 = scmp.lt.s32.totalorder %s332, 1
        %s334 = scalar_select %p333, %s332, 1
        %s335 = smul.addr %s334, 8
        %s336 = scalar_lea.vmem %s1, %s335
        %s337 = sadd.s32 %s32, %s34
        %s338 = sadd.s32 %s32, %s34
        %p339 = scmp.lt.s32.totalorder %s33, 1
        %s340 = scalar_select %p339, %s33, 1
        %p341 = scmp.lt.s32.totalorder %s338, 1
        %s342 = scalar_select %p341, %s338, 1
        %s343 = smul.addr %s340, 2
        %s344 = sadd.s32 %s342, %s343
        %s345 = smul.addr %s344, 8
        %s346 = scalar_lea.vmem %s3, %s345
        %s347 = sadd.s32 %s32, %s34
        %p348 = scmp.eq.s32.totalorder %s33, 0
        %p349 = scmp.eq.s32.totalorder %s34, 0
        %p350 = pnand %p348, %p349
        %p351 = pneg %p350
        // Predicated region
        $region45: #{tpu_custom_call.1} parent=35 // pred_check
          _
        $region46: #{tpu_custom_call.1} parent=35 // pred_check_branch
          %353 = sbr.rel (%p350) target = $region48
        $region47: #{tpu_custom_call.1} parent=35 // pred_region
          %vm354 = vcmask 130048
          %355 = vst.msk [vmem:[%s324] sm:$0xff] %vm354, 0.0
          %356 = vst.msk [vmem:[%s331] sm:$0xff] %vm354, 0.0
        $region48: #{tpu_custom_call.1} parent=35 // pred_fallthru
          _
        %v357 = vld [vmem:[%s282] sm:$0xff]
        %v358 = vld [vmem:[%s282 + $0x8] sm:$0xff]
        %v359 = vld [vmem:[%s282 + $0x10] sm:$0xff]
        %v360 = vld [vmem:[%s282 + $0x18] sm:$0xff]
        %v361 = vld [vmem:[%s336] sm:$0xff]
        %v362 = vld [vmem:[#allocation5] sm:$0xff]
        %vm363 = vcmask 64512
        %v365 = vsel %vm363, %v361, 0
        %367 = vmatprep.subr.mxu0 0.0
        %368 = vmatpush1.msra.mxu0 %v357
        %369 = vmatprep.subr.mxu0 0.0
        %370 = vmatpush1.msra.mxu0 0.0
        %371 = vmatprep.subr.mxu0 0.0
        %372 = vmatpush1.msra.mxu0 0.0
        %373 = vmatprep.subr.mxu0 0.0
        %374 = vmatpush1.msra.mxu0 0.0
        %375 = vmatprep.subr.mxu0 0.0
        %376 = vmatpush1.msra.mxu0 0.0
        %377 = vmatprep.subr.mxu0 0.0
        %378 = vmatpush1.msra.mxu0 0.0
        %379 = vmatprep.subr.mxu0 0.0
        %380 = vmatpush1.msra.mxu0 0.0
        %381 = vmatprep.subr.mxu0 0.0
        %382 = vmatpush1.msra.mxu0 0.0
        %383 = vmatprep.subr.mxu0 0.0
        %384 = vmatpush1.msra.mxu0 0.0
        %385 = vmatprep.subr.mxu0 0.0
        %386 = vmatpush1.msra.mxu0 0.0
        %387 = vmatprep.subr.mxu0 0.0
        %388 = vmatpush1.msra.mxu0 0.0
        %389 = vmatprep.subr.mxu0 0.0
        %390 = vmatpush1.msra.mxu0 0.0
        %391 = vmatprep.subr.mxu0 0.0
        %392 = vmatpush1.msra.mxu0 0.0
        %393 = vmatprep.subr.mxu0 0.0
        %394 = vmatpush1.msra.mxu0 0.0
        %395 = vmatprep.subr.mxu0 0.0
        %396 = vmatpush1.msra.mxu0 0.0
        %397 = vmatprep.subr.mxu0 0.0
        %398 = vmatpush1.msra.mxu0 0.0
        %399 = vmatprep.subr.mxu0 0.0
        %400 = vmatpush1.msra.mxu0 0.0
        %401 = vmatprep.subr.mxu0 0.0
        %402 = vmatpush1.msra.mxu0 0.0
        %403 = vmatprep.subr.mxu0 0.0
        %404 = vmatpush1.msra.mxu0 0.0
        %405 = vmatprep.subr.mxu0 0.0
        %406 = vmatpush1.msra.mxu0 0.0
        %407 = vmatprep.subr.mxu0 0.0
        %408 = vmatpush1.msra.mxu0 0.0
        %409 = vmatprep.subr.mxu0 0.0
        %410 = vmatpush1.msra.mxu0 0.0
        %411 = vmatprep.subr.mxu0 0.0
        %412 = vmatpush1.msra.mxu0 0.0
        %413 = vmatprep.subr.mxu0 0.0
        %414 = vmatpush1.msra.mxu0 0.0
        %415 = vmatprep.subr.mxu0 0.0
        %416 = vmatpush1.msra.mxu0 0.0
        %417 = vmatprep.subr.mxu0 0.0
        %418 = vmatpush1.msra.mxu0 0.0
        %419 = vmatprep.subr.mxu0 0.0
        %420 = vmatpush1.msra.mxu0 0.0
        %421 = vmatprep.subr.mxu0 0.0
        %422 = vmatpush1.msra.mxu0 0.0
        %423 = vmatprep.subr.mxu0 0.0
        %424 = vmatpush1.msra.mxu0 0.0
        %425 = vmatprep.subr.mxu0 0.0
        %426 = vmatpush1.msra.mxu0 0.0
        %427 = vmatprep.subr.mxu0 0.0
        %428 = vmatpush1.msra.mxu0 0.0
        %429 = vmatprep.subr.mxu0 0.0
        %430 = vmatpush1.msra.mxu0 0.0
        %431 = vmatprep.mubr.f32.mxu0 0.0
        %432 = vmatmul.mubr.f32.gmra.mrb[0].mxu0 %v365
        %v433 = vpop.f32.mrb[0].mxu0
        %v434 = vadd.f32 0.0, %v433
        %v435 = vpop.f32.mrb[0].mxu0
        %436 = vdwg.mxu0
        %437 = vmatprep.subr.mxu0 0.0
        %438 = vmatpush1.msra.mxu0 %v358
        %439 = vmatprep.subr.mxu0 0.0
        %440 = vmatpush1.msra.mxu0 0.0
        %441 = vmatprep.subr.mxu0 0.0
        %442 = vmatpush1.msra.mxu0 0.0
        %443 = vmatprep.subr.mxu0 0.0
        %444 = vmatpush1.msra.mxu0 0.0
        %445 = vmatprep.subr.mxu0 0.0
        %446 = vmatpush1.msra.mxu0 0.0
        %447 = vmatprep.subr.mxu0 0.0
        %448 = vmatpush1.msra.mxu0 0.0
        %449 = vmatprep.subr.mxu0 0.0
        %450 = vmatpush1.msra.mxu0 0.0
        %451 = vmatprep.subr.mxu0 0.0
        %452 = vmatpush1.msra.mxu0 0.0
        %453 = vmatprep.subr.mxu0 0.0
        %454 = vmatpush1.msra.mxu0 0.0
        %455 = vmatprep.subr.mxu0 0.0
        %456 = vmatpush1.msra.mxu0 0.0
        %457 = vmatprep.subr.mxu0 0.0
        %458 = vmatpush1.msra.mxu0 0.0
        %459 = vmatprep.subr.mxu0 0.0
        %460 = vmatpush1.msra.mxu0 0.0
        %461 = vmatprep.subr.mxu0 0.0
        %462 = vmatpush1.msra.mxu0 0.0
        %463 = vmatprep.subr.mxu0 0.0
        %464 = vmatpush1.msra.mxu0 0.0
        %465 = vmatprep.subr.mxu0 0.0
        %466 = vmatpush1.msra.mxu0 0.0
        %467 = vmatprep.subr.mxu0 0.0
        %468 = vmatpush1.msra.mxu0 0.0
        %469 = vmatprep.subr.mxu0 0.0
        %470 = vmatpush1.msra.mxu0 0.0
        %471 = vmatprep.subr.mxu0 0.0
        %472 = vmatpush1.msra.mxu0 0.0
        %473 = vmatprep.subr.mxu0 0.0
        %474 = vmatpush1.msra.mxu0 0.0
        %475 = vmatprep.subr.mxu0 0.0
        %476 = vmatpush1.msra.mxu0 0.0
        %477 = vmatprep.subr.mxu0 0.0
        %478 = vmatpush1.msra.mxu0 0.0
        %479 = vmatprep.subr.mxu0 0.0
        %480 = vmatpush1.msra.mxu0 0.0
        %481 = vmatprep.subr.mxu0 0.0
        %482 = vmatpush1.msra.mxu0 0.0
        %483 = vmatprep.subr.mxu0 0.0
        %484 = vmatpush1.msra.mxu0 0.0
        %485 = vmatprep.subr.mxu0 0.0
        %486 = vmatpush1.msra.mxu0 0.0
        %487 = vmatprep.subr.mxu0 0.0
        %488 = vmatpush1.msra.mxu0 0.0
        %489 = vmatprep.subr.mxu0 0.0
        %490 = vmatpush1.msra.mxu0 0.0
        %491 = vmatprep.subr.mxu0 0.0
        %492 = vmatpush1.msra.mxu0 0.0
        %493 = vmatprep.subr.mxu0 0.0
        %494 = vmatpush1.msra.mxu0 0.0
        %495 = vmatprep.subr.mxu0 0.0
        %496 = vmatpush1.msra.mxu0 0.0
        %497 = vmatprep.subr.mxu0 0.0
        %498 = vmatpush1.msra.mxu0 0.0
        %499 = vmatprep.subr.mxu0 0.0
        %500 = vmatpush1.msra.mxu0 0.0
        %501 = vmatprep.mubr.f32.mxu0 0.0
        %502 = vmatmul.mubr.f32.gmra.mrb[0].mxu0 %v365
        %v503 = vpop.f32.mrb[0].mxu0
        %v504 = vadd.f32 0.0, %v503
        %v505 = vpop.f32.mrb[0].mxu0
        %506 = vdwg.mxu0
        %507 = vmatprep.subr.mxu0 0.0
        %508 = vmatpush1.msra.mxu0 %v359
        %509 = vmatprep.subr.mxu0 0.0
        %510 = vmatpush1.msra.mxu0 0.0
        %511 = vmatprep.subr.mxu0 0.0
        %512 = vmatpush1.msra.mxu0 0.0
        %513 = vmatprep.subr.mxu0 0.0
        %514 = vmatpush1.msra.mxu0 0.0
        %515 = vmatprep.subr.mxu0 0.0
        %516 = vmatpush1.msra.mxu0 0.0
        %517 = vmatprep.subr.mxu0 0.0
        %518 = vmatpush1.msra.mxu0 0.0
        %519 = vmatprep.subr.mxu0 0.0
        %520 = vmatpush1.msra.mxu0 0.0
        %521 = vmatprep.subr.mxu0 0.0
        %522 = vmatpush1.msra.mxu0 0.0
        %523 = vmatprep.subr.mxu0 0.0
        %524 = vmatpush1.msra.mxu0 0.0
        %525 = vmatprep.subr.mxu0 0.0
        %526 = vmatpush1.msra.mxu0 0.0
        %527 = vmatprep.subr.mxu0 0.0
        %528 = vmatpush1.msra.mxu0 0.0
        %529 = vmatprep.subr.mxu0 0.0
        %530 = vmatpush1.msra.mxu0 0.0
        %531 = vmatprep.subr.mxu0 0.0
        %532 = vmatpush1.msra.mxu0 0.0
        %533 = vmatprep.subr.mxu0 0.0
        %534 = vmatpush1.msra.mxu0 0.0
        %535 = vmatprep.subr.mxu0 0.0
        %536 = vmatpush1.msra.mxu0 0.0
        %537 = vmatprep.subr.mxu0 0.0
        %538 = vmatpush1.msra.mxu0 0.0
        %539 = vmatprep.subr.mxu0 0.0
        %540 = vmatpush1.msra.mxu0 0.0
        %541 = vmatprep.subr.mxu0 0.0
        %542 = vmatpush1.msra.mxu0 0.0
        %543 = vmatprep.subr.mxu0 0.0
        %544 = vmatpush1.msra.mxu0 0.0
        %545 = vmatprep.subr.mxu0 0.0
        %546 = vmatpush1.msra.mxu0 0.0
        %547 = vmatprep.subr.mxu0 0.0
        %548 = vmatpush1.msra.mxu0 0.0
        %549 = vmatprep.subr.mxu0 0.0
        %550 = vmatpush1.msra.mxu0 0.0
        %551 = vmatprep.subr.mxu0 0.0
        %552 = vmatpush1.msra.mxu0 0.0
        %553 = vmatprep.subr.mxu0 0.0
        %554 = vmatpush1.msra.mxu0 0.0
        %555 = vmatprep.subr.mxu0 0.0
        %556 = vmatpush1.msra.mxu0 0.0
        %557 = vmatprep.subr.mxu0 0.0
        %558 = vmatpush1.msra.mxu0 0.0
        %559 = vmatprep.subr.mxu0 0.0
        %560 = vmatpush1.msra.mxu0 0.0
        %561 = vmatprep.subr.mxu0 0.0
        %562 = vmatpush1.msra.mxu0 0.0
        %563 = vmatprep.subr.mxu0 0.0
        %564 = vmatpush1.msra.mxu0 0.0
        %565 = vmatprep.subr.mxu0 0.0
        %566 = vmatpush1.msra.mxu0 0.0
        %567 = vmatprep.subr.mxu0 0.0
        %568 = vmatpush1.msra.mxu0 0.0
        %569 = vmatprep.subr.mxu0 0.0
        %570 = vmatpush1.msra.mxu0 0.0
        %571 = vmatprep.mubr.f32.mxu0 0.0
        %572 = vmatmul.mubr.f32.gmra.mrb[0].mxu0 %v365
        %v573 = vpop.f32.mrb[0].mxu0
        %v574 = vadd.f32 0.0, %v573
        %v575 = vpop.f32.mrb[0].mxu0
        %576 = vdwg.mxu0
        %577 = vmatprep.subr.mxu0 0.0
        %578 = vmatpush1.msra.mxu0 %v360
        %579 = vmatprep.subr.mxu0 0.0
        %580 = vmatpush1.msra.mxu0 0.0
        %581 = vmatprep.subr.mxu0 0.0
        %582 = vmatpush1.msra.mxu0 0.0
        %583 = vmatprep.subr.mxu0 0.0
        %584 = vmatpush1.msra.mxu0 0.0
        %585 = vmatprep.subr.mxu0 0.0
        %586 = vmatpush1.msra.mxu0 0.0
        %587 = vmatprep.subr.mxu0 0.0
        %588 = vmatpush1.msra.mxu0 0.0
        %589 = vmatprep.subr.mxu0 0.0
        %590 = vmatpush1.msra.mxu0 0.0
        %591 = vmatprep.subr.mxu0 0.0
        %592 = vmatpush1.msra.mxu0 0.0
        %593 = vmatprep.subr.mxu0 0.0
        %594 = vmatpush1.msra.mxu0 0.0
        %595 = vmatprep.subr.mxu0 0.0
        %596 = vmatpush1.msra.mxu0 0.0
        %597 = vmatprep.subr.mxu0 0.0
        %598 = vmatpush1.msra.mxu0 0.0
        %599 = vmatprep.subr.mxu0 0.0
        %600 = vmatpush1.msra.mxu0 0.0
        %601 = vmatprep.subr.mxu0 0.0
        %602 = vmatpush1.msra.mxu0 0.0
        %603 = vmatprep.subr.mxu0 0.0
        %604 = vmatpush1.msra.mxu0 0.0
        %605 = vmatprep.subr.mxu0 0.0
        %606 = vmatpush1.msra.mxu0 0.0
        %607 = vmatprep.subr.mxu0 0.0
        %608 = vmatpush1.msra.mxu0 0.0
        %609 = vmatprep.subr.mxu0 0.0
        %610 = vmatpush1.msra.mxu0 0.0
        %611 = vmatprep.subr.mxu0 0.0
        %612 = vmatpush1.msra.mxu0 0.0
        %613 = vmatprep.subr.mxu0 0.0
        %614 = vmatpush1.msra.mxu0 0.0
        %615 = vmatprep.subr.mxu0 0.0
        %616 = vmatpush1.msra.mxu0 0.0
        %617 = vmatprep.subr.mxu0 0.0
        %618 = vmatpush1.msra.mxu0 0.0
        %619 = vmatprep.subr.mxu0 0.0
        %620 = vmatpush1.msra.mxu0 0.0
        %621 = vmatprep.subr.mxu0 0.0
        %622 = vmatpush1.msra.mxu0 0.0
        %623 = vmatprep.subr.mxu0 0.0
        %624 = vmatpush1.msra.mxu0 0.0
        %625 = vmatprep.subr.mxu0 0.0
        %626 = vmatpush1.msra.mxu0 0.0
        %627 = vmatprep.subr.mxu0 0.0
        %628 = vmatpush1.msra.mxu0 0.0
        %629 = vmatprep.subr.mxu0 0.0
        %630 = vmatpush1.msra.mxu0 0.0
        %631 = vmatprep.subr.mxu0 0.0
        %632 = vmatpush1.msra.mxu0 0.0
        %633 = vmatprep.subr.mxu0 0.0
        %634 = vmatpush1.msra.mxu0 0.0
        %635 = vmatprep.subr.mxu0 0.0
        %636 = vmatpush1.msra.mxu0 0.0
        %637 = vmatprep.subr.mxu0 0.0
        %638 = vmatpush1.msra.mxu0 0.0
        %639 = vmatprep.subr.mxu0 0.0
        %640 = vmatpush1.msra.mxu0 0.0
        %641 = vmatprep.mubr.f32.mxu0 0.0
        %642 = vmatmul.mubr.f32.gmra.mrb[0].mxu0 %v365
        %v643 = vpop.f32.mrb[0].mxu0
        %v644 = vadd.f32 0.0, %v643
        %v645 = vpop.f32.mrb[0].mxu0
        %646 = vdwg.mxu0
        %v648 = vsel %vm363, %v434, 0
        %v651 = vsel %vm363, %v504, 0
        %v654 = vsel %vm363, %v574, 0
        %v657 = vsel %vm363, %v644, 0
        %659 = vmatprep.subr.mxu0 0.0
        %660 = vmatpush1.msra.mxu0 %v362
        %661 = vmatprep.subr.mxu0 0.0
        %662 = vmatpush1.msra.mxu0 0.0
        %663 = vmatprep.subr.mxu0 0.0
        %664 = vmatpush1.msra.mxu0 0.0
        %665 = vmatprep.subr.mxu0 0.0
        %666 = vmatpush1.msra.mxu0 0.0
        %667 = vmatprep.subr.mxu0 0.0
        %668 = vmatpush1.msra.mxu0 0.0
        %669 = vmatprep.subr.mxu0 0.0
        %670 = vmatpush1.msra.mxu0 0.0
        %671 = vmatprep.subr.mxu0 0.0
        %672 = vmatpush1.msra.mxu0 0.0
        %673 = vmatprep.subr.mxu0 0.0
        %674 = vmatpush1.msra.mxu0 0.0
        %675 = vmatprep.subr.mxu0 0.0
        %676 = vmatpush1.msra.mxu0 0.0
        %677 = vmatprep.subr.mxu0 0.0
        %678 = vmatpush1.msra.mxu0 0.0
        %679 = vmatprep.subr.mxu0 0.0
        %680 = vmatpush1.msra.mxu0 0.0
        %681 = vmatprep.subr.mxu0 0.0
        %682 = vmatpush1.msra.mxu0 0.0
        %683 = vmatprep.subr.mxu0 0.0
        %684 = vmatpush1.msra.mxu0 0.0
        %685 = vmatprep.subr.mxu0 0.0
        %686 = vmatpush1.msra.mxu0 0.0
        %687 = vmatprep.subr.mxu0 0.0
        %688 = vmatpush1.msra.mxu0 0.0
        %689 = vmatprep.subr.mxu0 0.0
        %690 = vmatpush1.msra.mxu0 0.0
        %691 = vmatprep.subr.mxu0 0.0
        %692 = vmatpush1.msra.mxu0 0.0
        %693 = vmatprep.subr.mxu0 0.0
        %694 = vmatpush1.msra.mxu0 0.0
        %695 = vmatprep.subr.mxu0 0.0
        %696 = vmatpush1.msra.mxu0 0.0
        %697 = vmatprep.subr.mxu0 0.0
        %698 = vmatpush1.msra.mxu0 0.0
        %699 = vmatprep.subr.mxu0 0.0
        %700 = vmatpush1.msra.mxu0 0.0
        %701 = vmatprep.subr.mxu0 0.0
        %702 = vmatpush1.msra.mxu0 0.0
        %703 = vmatprep.subr.mxu0 0.0
        %704 = vmatpush1.msra.mxu0 0.0
        %705 = vmatprep.subr.mxu0 0.0
        %706 = vmatpush1.msra.mxu0 0.0
        %707 = vmatprep.subr.mxu0 0.0
        %708 = vmatpush1.msra.mxu0 0.0
        %709 = vmatprep.subr.mxu0 0.0
        %710 = vmatpush1.msra.mxu0 0.0
        %711 = vmatprep.subr.mxu0 0.0
        %712 = vmatpush1.msra.mxu0 0.0
        %713 = vmatprep.subr.mxu0 0.0
        %714 = vmatpush1.msra.mxu0 0.0
        %715 = vmatprep.subr.mxu0 0.0
        %716 = vmatpush1.msra.mxu0 0.0
        %717 = vmatprep.subr.mxu0 0.0
        %718 = vmatpush1.msra.mxu0 0.0
        %719 = vmatprep.subr.mxu0 0.0
        %720 = vmatpush1.msra.mxu0 0.0
        %721 = vmatprep.subr.mxu0 0.0
        %722 = vmatpush1.msra.mxu0 0.0
        %723 = vmatprep.mubr.f32.mxu0 0.0
        %724 = vmatmul.mubr.f32.gmra.mrb[0].mxu0 %v648
        %v725 = vpop.f32.mrb[0].mxu0
        %v726 = vadd.f32 0.0, %v725
        %v727 = vpop.f32.mrb[0].mxu0
        %728 = vmatprep.mubr.f32.mxu0 0.0
        %729 = vmatmul.mubr.f32.gmra.mrb[0].mxu0 %v651
        %v730 = vpop.f32.mrb[0].mxu0
        %v731 = vadd.f32 0.0, %v730
        %v732 = vpop.f32.mrb[0].mxu0
        %733 = vmatprep.mubr.f32.mxu0 0.0
        %734 = vmatmul.mubr.f32.gmra.mrb[0].mxu0 %v654
        %v735 = vpop.f32.mrb[0].mxu0
        %v736 = vadd.f32 0.0, %v735
        %v737 = vpop.f32.mrb[0].mxu0
        %738 = vmatprep.mubr.f32.mxu0 0.0
        %739 = vmatmul.mubr.f32.gmra.mrb[0].mxu0 %v657
        %v740 = vpop.f32.mrb[0].mxu0
        %v741 = vadd.f32 0.0, %v740
        %v742 = vpop.f32.mrb[0].mxu0
        %743 = vdwg.mxu0
        %v744 = vld [vmem:[%s346] sm:$0xff]
        %v745 = vmax.f32 %v726, %v731
        %v746 = vmax.f32 %v745, %v736
        %v747 = vmax.f32 %v746, %v741
        %v748 = vsub.f32 %v726, %v747
        %v749 = vmul.f32 %v748, 1.442695
        %v750 = vpow.pop %v749
        %v751 = vadd.f32 %v750, 0.0
        %vm752 = vcmp.eq.s32.totalorder %v744, 0
        %v753 = vsel %vm752, %v726, 0.0
        %v754 = vadd.f32 %v753, 0.0
        %vm755 = vcmp.eq.f32.partialorder %v726, %v747
        %v756 = vsel %vm755, 0, 4
        %v757 = vsel %vm755, %v756, 4
        %v758 = vsub.f32 %v731, %v747
        %v759 = vmul.f32 %v758, 1.442695
        %v760 = vpow.pop %v759
        %v761 = vadd.f32 %v751, %v760
        %vm762 = vcmp.eq.s32.totalorder %v744, 1
        %v763 = vsel %vm762, %v731, 0.0
        %v764 = vadd.f32 %v754, %v763
        %vm765 = vcmp.eq.f32.partialorder %v731, %v747
        %v766 = vsel %vm765, 1, 4
        %vm767 = vcmp.lt.s32.totalorder %v757, %v766
        %v768 = vsel %vm767, %v757, %v766
        %v769 = vsub.f32 %v736, %v747
        %v770 = vmul.f32 %v769, 1.442695
        %v771 = vpow.pop %v770
        %v772 = vadd.f32 %v761, %v771
        %vm773 = vcmp.eq.s32.totalorder %v744, 2
        %v774 = vsel %vm773, %v736, 0.0
        %v775 = vadd.f32 %v764, %v774
        %vm776 = vcmp.eq.f32.partialorder %v736, %v747
        %v777 = vsel %vm776, 2, 4
        %vm778 = vcmp.lt.s32.totalorder %v768, %v777
        %v779 = vsel %vm778, %v768, %v777
        %v780 = vsub.f32 %v741, %v747
        %v781 = vmul.f32 %v780, 1.442695
        %v782 = vpow.pop %v781
        %v783 = vadd.f32 %v772, %v782
        %vm784 = vcmp.eq.s32.totalorder %v744, 3
        %v785 = vsel %vm784, %v741, 0.0
        %v786 = vadd.f32 %v775, %v785
        %vm787 = vcmp.eq.f32.partialorder %v741, %v747
        %v788 = vsel %vm787, 3, 4
        %vm789 = vcmp.lt.s32.totalorder %v779, %v788
        %v790 = vsel %vm789, %v779, %v788
        %v791 = vlog2.pop %v783
        %v792 = vmul.f32 %v791, 0.6931472
        %v793 = vadd.f32 %v792, %v747
        %vm794 = vcmp.ne.s32.totalorder %v744, 255
        %vm795 = vcmp.ge.s32.totalorder %v744, 0
        %vm796 = vmand %vm794, %vm795
        %v797 = vld [vmem:[%s324] sm:$0xff]
        %v798 = vsub.f32 %v793, %v786
        %v799 = vsel %vm796, %v798, 0.0
        %v800 = vadd.f32 %v797, %v799
        %vm801 = vcmask 130048
        %802 = vst.msk [vmem:[%s324] sm:$0xff] %vm801, %v800
        %v803 = vld [vmem:[%s331] sm:$0xff]
        %vm804 = vcmp.eq.s32.totalorder %v790, %v744
        %v805 = vsel %vm804, 1.0, 0.0
        %v806 = vadd.f32 %v803, %v805
        %807 = vst.msk [vmem:[%s331] sm:$0xff] %vm801, %v806
        %s808 = sand.u32 %s159, 1
        %s809 = scalar_lea.sflag [#allocation4], %s808
        %s810 = sand.u32 %s159, 1
        %s811 = smul.addr %s810, 8
        %s812 = scalar_lea.vmem [#allocation7], %s811
        %s813 = sand.u32 %s185, 1
        %s814 = scalar_lea.sflag [#allocation9], %s813
        %s815 = sand.u32 %s185, 1
        %s816 = smul.addr %s815, 8
        %s817 = scalar_lea.vmem [#allocation8], %s816
        // Predicated region
        $region49: #{tpu_custom_call.1} parent=35 // pred_check
          %p818 = pneg %p169
        $region50: #{tpu_custom_call.1} parent=35 // pred_check_branch
          %820 = sbr.rel (%p818) target = $region52
        $region51: #{tpu_custom_call.1} parent=35 // pred_region
          %s822 = ssub.s32 128, 128
          %823 = vsyncadd %s809, %s822
          %s824 = smul.addr %s32, 128
          %s825 = scalar_lea.hbm %s4, %s824
          %s827 = sshll.u32 %s812, 4
          %s828 = int_to_ptr.vmem [resolvable:$true] %s827
          %830 = dma.vmem_to_hbm [thread:$0]  %s828, 128, %s825, %s809
        $region52: #{tpu_custom_call.1} parent=35 // pred_fallthru
          _
        // Predicated region
        $region53: #{tpu_custom_call.1} parent=35 // pred_check
          %p831 = pneg %p195
        $region54: #{tpu_custom_call.1} parent=35 // pred_check_branch
          %833 = sbr.rel (%p831) target = $region56
        $region55: #{tpu_custom_call.1} parent=35 // pred_region
          %s835 = ssub.s32 128, 128
          %836 = vsyncadd %s814, %s835
          %s837 = smul.addr %s32, 128
          %s838 = scalar_lea.hbm %s5, %s837
          %s840 = sshll.u32 %s817, 4
          %s841 = int_to_ptr.vmem [resolvable:$true] %s840
          %843 = dma.vmem_to_hbm [thread:$0]  %s841, 128, %s838, %s814
        $region56: #{tpu_custom_call.1} parent=35 // pred_fallthru
          _
      $region36: #{tpu_custom_call.1} parent=5 // pred_fallthru
        _
      %p844 = scmp.le.s32.totalorder 2, %s22
      // Predicated region
      $region57: #{tpu_custom_call.1} parent=5 // pred_check
        %p845 = pneg %p844
      $region58: #{tpu_custom_call.1} parent=5 // pred_check_branch
        %847 = sbr.rel (%p845) target = $region60
      $region59: #{tpu_custom_call.1} parent=5 // pred_region
        %s848 = ssub.s32 %s22, 2
        // Predicated region
        $region61: #{tpu_custom_call.1} parent=59 // pred_check
          %p849 = pneg %p175
        $region62: #{tpu_custom_call.1} parent=59 // pred_check_branch
          %851 = sbr.rel (%p849) target = $region64
        $region63: #{tpu_custom_call.1} parent=59 // pred_region
          %s852 = sand.u32 %s160, 1
          %s853 = scalar_lea.sflag [#allocation4], %s852
          %s854 = sand.u32 %s160, 1
          %s855 = smul.addr %s854, 8
          %s856 = scalar_lea.vmem [#allocation7], %s855
          %857 = dma.done %s853, 128
        $region64: #{tpu_custom_call.1} parent=59 // pred_fallthru
          _
        // Predicated region
        $region65: #{tpu_custom_call.1} parent=59 // pred_check
          %p858 = pneg %p201
        $region66: #{tpu_custom_call.1} parent=59 // pred_check_branch
          %860 = sbr.rel (%p858) target = $region68
        $region67: #{tpu_custom_call.1} parent=59 // pred_region
          %s861 = sand.u32 %s186, 1
          %s862 = scalar_lea.sflag [#allocation9], %s861
          %s863 = sand.u32 %s186, 1
          %s864 = smul.addr %s863, 8
          %s865 = scalar_lea.vmem [#allocation8], %s864
          %866 = dma.done %s862, 128
        $region68: #{tpu_custom_call.1} parent=59 // pred_fallthru
          _
      $region60: #{tpu_custom_call.1} parent=5 // pred_fallthru
        _
    $region6: #{tpu_custom_call.1} parent=1 // loop_footer
      %s26 = sadd.s32 1, %s22
    $region7: #{tpu_custom_call.1} parent=1 // loop_footer_branch
      %21 = sbr.rel target = $region3
    $region8: #{tpu_custom_call.1} parent=1 // loop_exit
      _
    %867 = vsyncpa [#allocation3], 1
    %s868 = scalar_lea.sflag [#allocation3], 1
    %869 = vsyncpa %s868, 1
    %870 = vsyncpa [#allocation6], 1
    %871 = vsyncpa [#allocation4], 1
    %s872 = scalar_lea.sflag [#allocation4], 1
    %873 = vsyncpa %s872, 1
    %874 = vsyncpa [#allocation9], 1
    %s875 = scalar_lea.sflag [#allocation9], 1
    %876 = vsyncpa %s875, 1

</llo_original>
